<compile_context>
chip_gen: v7x
topology: tpu7x:2x2x1
jax: 0.10.0
libtpu: 0.0.40
codegen_flags: <defaults>
</compile_context>

<pallas_src>
import functools

import jax
import jax.numpy as jnp
from jax import lax
from jax.experimental import pallas as pl
from jax.experimental.pallas import tpu as pltpu


# ----------------------------- fused focal-loss kernel -----------------------------
def _focal_loss_kernel(logits_ref, targets_ref, *rest,
                       gamma, n_valid, block_rows, has_alpha):
    if has_alpha:
        alpha_ref, out_ref = rest
    else:
        (out_ref,) = rest

    i = pl.program_id(0)

    x = logits_ref[...].astype(jnp.float32)            # (TB, C) cast in VMEM (bf16 on the wire)
    t = targets_ref[...]                                # (TB, 1) int32 class indices
    TB, C = x.shape

    # --- numerically stable log-softmax pieces (all f32, all in VMEM) ---
    m = jnp.max(x, axis=-1, keepdims=True)              # (TB, 1)
    z = x - m                                            # (TB, C)
    ez = jnp.exp(z)                                      # (TB, C)
    sez = jnp.sum(ez, axis=-1, keepdims=True)            # (TB, 1)
    lse = jnp.log(sez)                                   # (TB, 1)

    # one-hot mask for the target gather (no per-row dynamic indexing, no float cast)
    cls = lax.broadcasted_iota(jnp.int32, (TB, C), 1)    # (TB, C)
    hit = cls == t                                        # (TB, C) bool

    if has_alpha:
        a = alpha_ref[...].astype(jnp.float32)            # (1, C) class weights
        logp = z - lse                                     # (TB, C)
        # fold alpha into logp -> single one-hot row reduction
        # ce_i = -alpha[t_i] * log p_{t_i}   (PyTorch reduction='none' semantics)
        ce = -jnp.sum(jnp.where(hit, a * logp, 0.0), axis=-1, keepdims=True)   # (TB, 1)
        pt = jnp.exp(-ce)                                  # == p_t ** alpha_t, per spec formula
    else:
        z_t = jnp.sum(jnp.where(hit, z, 0.0), axis=-1, keepdims=True)           # (TB, 1)
        ez_t = jnp.sum(jnp.where(hit, ez, 0.0), axis=-1, keepdims=True)         # (TB, 1)
        ce = lse - z_t                                     # -log p_t
        pt = ez_t / sez                                    # reuse exp(z): exactly exp(-ce)

    om = jnp.maximum(1.0 - pt, 0.0)                        # guard tiny negatives
    if gamma == 2.0:
        fw = om * om
    elif gamma == 1.0:
        fw = om
    elif gamma == 0.0:
        fw = jnp.ones_like(om)
    else:
        # general gamma; safe because fw multiplies ce (== 0 when om == 0)
        fw = jnp.exp(gamma * jnp.log(jnp.maximum(om, 1e-30)))
    focal = fw * ce                                        # (TB, 1)

    # mask rows beyond the true batch (last, possibly partial, tile)
    row = lax.broadcasted_iota(jnp.int32, (TB, 1), 0) + i * block_rows
    focal = jnp.where(row < n_valid, focal, 0.0)

    partial = jnp.sum(focal) * (1.0 / n_valid)

    # lane-dense, unmasked store of this tile's partial (broadcast over an 8x128 block)
    out_ref[...] = jnp.full(out_ref.shape, partial, out_ref.dtype)


# ------------------------------------ wrapper ---------------------------------------
def _choose_block_rows(batch, num_classes, itemsize):
    # ~2 MiB logits block -> ~4-8 MiB with double-buffering + f32 temporaries:
    # comfortable on v7x (64 MiB physical / 32 MiB scoped) and below roofline-friendly
    # tile sizes measured on v5e/v6e.
    target_bytes = 2 * 1024 * 1024
    rows = target_bytes // max(1, num_classes * itemsize)
    rows = int(max(8, min(rows, 4096)))
    rows -= rows % 8
    if rows >= batch:
        return batch
    return rows


def focal_loss(logits, targets, alpha=None, gamma=2.0, block_rows=None):
    """Pallas TPU focal loss. logits: (B, C) float (any dtype), targets: (B,) int."""
    logits = jnp.asarray(logits)                       # keep native dtype on the wire
    B, C = logits.shape
    targets2d = jnp.asarray(targets, jnp.int32).reshape(B, 1)

    if block_rows is None:
        block_rows = _choose_block_rows(B, C, logits.dtype.itemsize)
    block_rows = int(min(int(block_rows), B))
    if block_rows < B:
        block_rows = max(8, block_rows - block_rows % 8)   # (8,128) sublane rule
    num_tiles = int(pl.cdiv(B, block_rows))

    has_alpha = alpha is not None

    kernel = functools.partial(
        _focal_loss_kernel,
        gamma=float(gamma),
        n_valid=int(B),
        block_rows=int(block_rows),
        has_alpha=has_alpha,
    )

    in_specs = [
        pl.BlockSpec((block_rows, C), lambda i: (i, 0)),   # logits tile
        pl.BlockSpec((block_rows, 1), lambda i: (i, 0)),   # targets tile
    ]
    args = [logits, targets2d]
    if has_alpha:
        alpha_arr = jnp.asarray(alpha, jnp.float32).reshape(1, C)
        in_specs.append(pl.BlockSpec((1, C), lambda i: (0, 0)))
        args.append(alpha_arr)

    out_specs = pl.BlockSpec((None, 8, 128), lambda i: (i, 0, 0))   # per-tile partial block

    cost = pl.CostEstimate(
        flops=int(12 * B * C),
        transcendentals=int(B * (C + 2)),
        bytes_accessed=int(logits.size) * logits.dtype.itemsize
                       + int(B) * 4
                       + int(num_tiles) * 8 * 128 * 4,
    )

    partials = pl.pallas_call(
        kernel,
        out_shape=jax.ShapeDtypeStruct((num_tiles, 8, 128), jnp.float32),
        grid=(num_tiles,),
        in_specs=in_specs,
        out_specs=out_specs,
        compiler_params=pltpu.CompilerParams(
            dimension_semantics=("parallel",),             # independent tiles -> v7x megacore
            vmem_limit_bytes=32 * 1024 * 1024,
        ),
        cost_estimate=cost,
    )(*args)

    # tiny cross-tile (and cross-TensorCore on v7x) reduction in plain JAX
    return jnp.sum(partials[:, 0, 0])


# ------------------------------- pure-JAX reference --------------------------------
def focal_loss_ref(logits, targets, alpha=None, gamma=2.0):
    logp = jax.nn.log_softmax(jnp.asarray(logits, jnp.float32), axis=-1)
    nll = -jnp.take_along_axis(logp, jnp.asarray(targets)[:, None], axis=-1)[:, 0]
    if alpha is not None:
        nll = jnp.asarray(alpha, jnp.float32)[jnp.asarray(targets)] * nll
    pt = jnp.exp(-nll)
    return jnp.mean((1.0 - pt) ** gamma * nll)


if __name__ == "__main__":
    key = jax.random.PRNGKey(0)
    k_logits, k_tgt, k_logits2, k_tgt2 = jax.random.split(key, 4)

    # small shapes consistent with the module: batch=8, num_classes=4
    B, C = 8, 4
    logits = jax.random.normal(k_logits, (B, C), jnp.float32) * 2.0
    targets = jax.random.randint(k_tgt, (B,), 0, C, jnp.int32)

    # 1) default module config: alpha=None, gamma=2.0
    loss = jax.block_until_ready(focal_loss(logits, targets, alpha=None, gamma=2.0))
    ref = focal_loss_ref(logits, targets, alpha=None, gamma=2.0)
    assert loss.shape == ()
    assert bool(jnp.isfinite(loss))
    assert bool(jnp.allclose(loss, ref, rtol=1e-5, atol=1e-6)), (loss, ref)

    # 2) class-weight (alpha) path
    alpha = jnp.array([0.25, 0.5, 0.75, 1.0], jnp.float32)
    loss_w = jax.block_until_ready(focal_loss(logits, targets, alpha=alpha, gamma=2.0))
    ref_w = focal_loss_ref(logits, targets, alpha=alpha, gamma=2.0)
    assert bool(jnp.isfinite(loss_w))
    assert bool(jnp.allclose(loss_w, ref_w, rtol=1e-5, atol=1e-6)), (loss_w, ref_w)

    # 3) bf16 logits on the wire (kernel casts to f32 internally)
    logits_bf16 = logits.astype(jnp.bfloat16)
    loss_bf = jax.block_until_ready(focal_loss(logits_bf16, targets, alpha=None, gamma=2.0))
    ref_bf = focal_loss_ref(logits_bf16.astype(jnp.float32), targets, alpha=None, gamma=2.0)
    assert bool(jnp.isfinite(loss_bf))
    assert bool(jnp.allclose(loss_bf, ref_bf, rtol=1e-5, atol=1e-5)), (loss_bf, ref_bf)

    # 4) multi-tile grid with a ragged last tile (masking + partial-sum path)
    B2 = 20
    logits2 = jax.random.normal(k_logits2, (B2, C), jnp.float32) * 2.0
    targets2 = jax.random.randint(k_tgt2, (B2,), 0, C, jnp.int32)
    loss_t = jax.block_until_ready(
        focal_loss(logits2, targets2, alpha=None, gamma=2.0, block_rows=8))
    ref_t = focal_loss_ref(logits2, targets2, alpha=None, gamma=2.0)
    assert bool(jnp.isfinite(loss_t))
    assert bool(jnp.allclose(loss_t, ref_t, rtol=1e-5, atol=1e-6)), (loss_t, ref_t)

    print("KERNEL_OK")
</pallas_src>

<mosaic_0001>
module attributes {stable_mosaic.version = 11 : i64} {
  func.func @_focal_loss_kernel(%arg0: i32, %arg1: memref<8x4xf32, #tpu.memory_space<vmem>>, %arg2: memref<8x1xi32, #tpu.memory_space<vmem>>, %arg3: memref<1x8x128xf32, #tpu.memory_space<vmem>>) attributes {dimension_semantics = [#tpu.dimension_semantics<parallel>], iteration_bounds = array<i64: 1>, scalar_prefetch = 0 : i64, scratch_operands = 0 : i64, tpu.core_type = #tpu.core_type<tc>, window_params = [{transform_indices = @transform_0, window_bounds = array<i64: 8, 4>}, {transform_indices = @transform_1, window_bounds = array<i64: 8, 1>}, {transform_indices = @transform_2, window_bounds = array<i64: 1, 8, 128>}]} {
    %c0 = arith.constant 0 : index
    %c0_0 = arith.constant 0 : index
    %0 = vector.load %arg1[%c0, %c0_0] : memref<8x4xf32, #tpu.memory_space<vmem>>, vector<8x4xf32>
    %c0_1 = arith.constant 0 : index
    %c0_2 = arith.constant 0 : index
    %1 = vector.load %arg2[%c0_1, %c0_2] : memref<8x1xi32, #tpu.memory_space<vmem>>, vector<8x1xi32>
    %cst = arith.constant dense<0xFF800000> : vector<8xf32>
    %2 = vector.multi_reduction <maximumf>, %0, %cst [1] : vector<8x4xf32> to vector<8xf32>
    %3 = vector.shape_cast %2 : vector<8xf32> to vector<8x1xf32>
    %4 = vector.broadcast %3 : vector<8x1xf32> to vector<8x4xf32>
    %5 = arith.subf %0, %4 : vector<8x4xf32>
    %6 = math.exp %5 : vector<8x4xf32>
    %cst_3 = arith.constant dense<0.000000e+00> : vector<8xf32>
    %7 = vector.multi_reduction <add>, %6, %cst_3 [1] : vector<8x4xf32> to vector<8xf32>
    %8 = vector.shape_cast %7 : vector<8xf32> to vector<8x1xf32>
    %9 = math.log %8 : vector<8x1xf32>
    %10 = tpu.iota {dimensions = array<i32: 1>} : vector<8x4xi32>
    %11 = vector.broadcast %1 : vector<8x1xi32> to vector<8x4xi32>
    %12 = arith.cmpi eq, %10, %11 : vector<8x4xi32>
    %cst_4 = arith.constant 0.000000e+00 : f32
    %13 = vector.broadcast %cst_4 : f32 to vector<8x4xf32>
    %14 = arith.select %12, %5, %13 : vector<8x4xi1>, vector<8x4xf32>
    %cst_5 = arith.constant dense<0.000000e+00> : vector<8xf32>
    %15 = vector.multi_reduction <add>, %14, %cst_5 [1] : vector<8x4xf32> to vector<8xf32>
    %16 = vector.shape_cast %15 : vector<8xf32> to vector<8x1xf32>
    %cst_6 = arith.constant 0.000000e+00 : f32
    %17 = vector.broadcast %cst_6 : f32 to vector<8x4xf32>
    %18 = arith.select %12, %6, %17 : vector<8x4xi1>, vector<8x4xf32>
    %cst_7 = arith.constant dense<0.000000e+00> : vector<8xf32>
    %19 = vector.multi_reduction <add>, %18, %cst_7 [1] : vector<8x4xf32> to vector<8xf32>
    %20 = vector.shape_cast %19 : vector<8xf32> to vector<8x1xf32>
    %21 = arith.subf %9, %16 : vector<8x1xf32>
    %22 = arith.divf %20, %8 : vector<8x1xf32>
    %cst_8 = arith.constant 1.000000e+00 : f32
    %23 = vector.broadcast %cst_8 : f32 to vector<8x1xf32>
    %24 = arith.subf %23, %22 : vector<8x1xf32>
    %cst_9 = arith.constant 0.000000e+00 : f32
    %25 = vector.broadcast %cst_9 : f32 to vector<8x1xf32>
    %26 = arith.maximumf %24, %25 : vector<8x1xf32>
    %27 = arith.mulf %26, %26 : vector<8x1xf32>
    %28 = arith.mulf %27, %21 : vector<8x1xf32>
    %29 = tpu.iota {dimensions = array<i32: 0>} : vector<8x1xi32>
    %c8_i32 = arith.constant 8 : i32
    %30 = arith.muli %arg0, %c8_i32 : i32
    %31 = vector.broadcast %30 : i32 to vector<8x1xi32>
    %32 = arith.addi %29, %31 : vector<8x1xi32>
    %c8_i32_10 = arith.constant 8 : i32
    %33 = vector.broadcast %c8_i32_10 : i32 to vector<8x1xi32>
    %34 = arith.cmpi slt, %32, %33 : vector<8x1xi32>
    %cst_11 = arith.constant 0.000000e+00 : f32
    %35 = vector.broadcast %cst_11 : f32 to vector<8x1xf32>
    %36 = arith.select %34, %28, %35 : vector<8x1xi1>, vector<8x1xf32>
    %37 = vector.shape_cast %36 : vector<8x1xf32> to vector<1x8x1xf32>
    %cst_12 = arith.constant dense<0.000000e+00> : vector<1xf32>
    %38 = vector.multi_reduction <add>, %37, %cst_12 [1, 2] : vector<1x8x1xf32> to vector<1xf32>
    %39 = vector.shape_cast %38 : vector<1xf32> to vector<1x1x1xf32>
    %40 = vector.extract %39[0, 0, 0] : f32 from vector<1x1x1xf32>
    %cst_13 = arith.constant 1.250000e-01 : f32
    %41 = arith.mulf %40, %cst_13 : f32
    %42 = vector.broadcast %41 : f32 to vector<8x128xf32>
    %c0_14 = arith.constant 0 : index
    %c0_15 = arith.constant 0 : index
    %c0_16 = arith.constant 0 : index
    %43 = vector.load %arg3[%c0_14, %c0_15, %c0_16] : memref<1x8x128xf32, #tpu.memory_space<vmem>>, vector<1x8x128xf32>
    %44 = vector.shape_cast %43 : vector<1x8x128xf32> to vector<8x128xf32>
    %45 = vector.shape_cast %42 : vector<8x128xf32> to vector<1x8x128xf32>
    tpu.vector_store %arg3[%c0_14, %c0_15, %c0_16], %45 {strides = array<i32>} : memref<1x8x128xf32, #tpu.memory_space<vmem>>, vector<1x8x128xf32>,
    return
  }
  func.func @transform_0(%arg0: i32) -> (i32, i32) {
    %c0_i32 = arith.constant 0 : i32
    %c0_i32_0 = arith.constant 0 : i32
    return %arg0, %c0_i32 : i32, i32
  }
  func.func @transform_1(%arg0: i32) -> (i32, i32) {
    %c0_i32 = arith.constant 0 : i32
    %c0_i32_0 = arith.constant 0 : i32
    return %arg0, %c0_i32 : i32, i32
  }
  func.func @transform_2(%arg0: i32) -> (i32, i32, i32) {
    %c0_i32 = arith.constant 0 : i32
    %c0_i32_0 = arith.constant 0 : i32
    %c0_i32_1 = arith.constant 0 : i32
    return %arg0, %c0_i32, %c0_i32_0 : i32, i32, i32
  }
}

</mosaic_0001>

<llo_original>
// kernel: tpu_custom_call.1
$region0: #{tpu_custom_call.1}
  #allocation0 [shape = 'u32[]', space=smem, size = 0x4, offset = 0x4, fixed_abs, tag = 'smem constant byte address 0x4 - core index']
  #allocation1 [shape = 'u32[144,128]{1,0:T(1,128)}', space=vmem, size = 0x12000, scoped, tag = 'internal scratch']
  %s0 = inlined_call_operand.vmem [shape: f32[8,4], index: 0, kind: input, shape index: {}]
  %s1 = inlined_call_operand.vmem [shape: s32[8,1], index: 1, kind: input, shape index: {}]
  %s2 = inlined_call_operand.hbm [shape: f32[1,8,128], index: 2, kind: output, shape index: {}]
  %s3 = sld [smem:[#allocation0]]
  $region18: #{tpu_custom_call.1} parent=0
    _
  %s5 = ssub.s32 1, %s3
  %s6 = scalar_select 0, %s5, %s3
  $region1: #{tpu_custom_call.1} parent=0
    #allocation2 [shape = 'u8[4096]{0}', space=vmem, size = 0x1000, scoped, tag = 'output window, operand 0, single buffered']
    #allocation3 [shape = 's32[1]{0}', space=sflag, size = 0x4, scoped, tag = 'scoped memory for tpu_custom_call.1']
    %7 = vsyncpa [#allocation3], 0
    // Predicated region
    $region2: #{tpu_custom_call.1} parent=1 // pred_check
      _
    $region3: #{tpu_custom_call.1} parent=1 // pred_check_branch
      %9 = sbr.rel (0) target = $region5
    $region4: #{tpu_custom_call.1} parent=1 // pred_region
      _
    $region5: #{tpu_custom_call.1} parent=1 // pred_fallthru
      _
    // Predicated region
    $region6: #{tpu_custom_call.1} parent=1 // pred_check
      _
    $region7: #{tpu_custom_call.1} parent=1 // pred_check_branch
      %11 = sbr.rel (0) target = $region9
    $region8: #{tpu_custom_call.1} parent=1 // pred_region
      _
    $region9: #{tpu_custom_call.1} parent=1 // pred_fallthru
      _
    %v12 = vld [vmem:[%s0] sm:$0xff]
    %v13 = vld [vmem:[%s1] sm:$0xff]
    %vm14 = vcmask 31744
    %v15 = vsel %vm14, %v12, -inf
    %16 = vmax.xlane.f32.xlu0 %v15
    %v17 = vpop.xlane.xlu0 %16
    %v18 = vsub.f32 %v12, %v17
    %v19 = vmul.f32 %v18, 1.442695
    %v20 = vpow.pop %v19
    %v21 = vsel %vm14, %v20, 0.0
    %22 = vadd.xlane.f32.xlu0 %v21
    %v23 = vpop.xlane.xlu0 %22
    %v24 = vlog2.pop %v23
    %v25 = vmul.f32 %v24, 0.6931472
    %v26 = vlaneseq
    %v27 = vand.u32 %v26, 127
    %28 = vset.pattern.permute.xlu0 0
    %29 = vperm.xlu0 %28, %v13
    %v30 = vpop.permute.xlu0 %29
    %vm31 = vcmp.eq.s32.totalorder %v27, %v30
    %v32 = vsel %vm31, %v18, 0.0
    %v33 = vsel %vm14, %v32, 0.0
    %34 = vadd.xlane.f32.xlu0 %v33
    %v35 = vpop.xlane.xlu0 %34
    %v36 = vsel %vm31, %v20, 0.0
    %v37 = vsel %vm14, %v36, 0.0
    %38 = vadd.xlane.f32.xlu0 %v37
    %v39 = vpop.xlane.xlu0 %38
    %v40 = vsub.f32 %v25, %v35
    %v41 = vrcp.pop %v23
    %v42 = vmul.f32 %v39, %v41
    %v43 = vsub.f32 1.0, %v42
    %v44 = vmax.f32 %v43, 0.0
    %v45 = vmul.f32 %v44, %v44
    %v46 = vmul.f32 %v45, %v40
    %v47 = vlaneseq
    %v48 = vshrl.u32 %v47, 7
    %s49 = smul.u32 0, 8
    %v50 = vstv %s49
    %v51 = vadd.s32 %v48, %v50
    %vm52 = vcmp.lt.s32.totalorder %v51, 8
    %v53 = vsel %vm52, %v46, 0.0
    %vm54 = vcmask 7168
    %v55 = vsel %vm54, %v53, 0.0
    %56 = vadd.xlane.f32.xlu0 %v55
    %v57 = vpop.xlane.xlu0 %56
    %v58 = vrot.slane %v57, 4
    %v59 = vadd.f32 %v57, %v58
    %v60 = vrot.slane %v59, 2
    %v61 = vadd.f32 %v59, %v60
    %v62 = vrot.slane %v61, 1
    %v63 = vadd.f32 %v61, %v62
    %s64 = vtos %v63
    %s65 = smul.f32 %s64, 0.125
    %v66 = vstv %s65
    %67 = vst [vmem:[#allocation2] sm:$0xff] %v66
    // Predicated region
    $region10: #{tpu_custom_call.1} parent=1 // pred_check
      _
    $region11: #{tpu_custom_call.1} parent=1 // pred_check_branch
      %69 = sbr.rel (0) target = $region13
    $region12: #{tpu_custom_call.1} parent=1 // pred_region
      %s71 = ssub.s32 128, 128
      %72 = vsyncadd [#allocation3], %s71
      %s74 = sshll.u32 [#allocation2], 4
      %s75 = int_to_ptr.vmem [resolvable:$true] %s74
      %77 = dma.vmem_to_hbm [thread:$0]  %s75, 128, %s2, [#allocation3]
    $region13: #{tpu_custom_call.1} parent=1 // pred_fallthru
      _
    // Predicated region
    $region14: #{tpu_custom_call.1} parent=1 // pred_check
      _
    $region15: #{tpu_custom_call.1} parent=1 // pred_check_branch
      %79 = sbr.rel (0) target = $region17
    $region16: #{tpu_custom_call.1} parent=1 // pred_region
      %80 = dma.done [#allocation3], 128
    $region17: #{tpu_custom_call.1} parent=1 // pred_fallthru
      _
    %81 = vsyncpa [#allocation3], 1

</llo_original>
